<compile_context>
chip_gen: v5e
topology: v5e:2x2
jax: 0.10.0
libtpu: 0.0.40
codegen_flags: <defaults>
</compile_context>

<pallas_src>
import functools

import numpy as np
import jax
import jax.numpy as jnp
from jax.experimental import pallas as pl
from jax.experimental.pallas import tpu as pltpu


def _loss_kernel(label_smoothing, inv_lm_sum,
                 logit_ref, target_ref, tmask_ref, wtgt_ref, wlm_ref, out_ref):
    """Label-smoothed cross-entropy for one (BN, C, TT) logit tile.

    logit_ref : [BN, C, TT]  original [N, C, T] layout (C on sublanes, T on lanes)
    target_ref: [BN, TT] int32
    tmask_ref : [BN, TT] f32   (1.0 iff target not in ignore_indices)
    wtgt_ref  : [BN, TT] f32   ((class_weight * logit_mask) gathered at target)
    wlm_ref   : [1, C, 1] f32  (class_weight * logit_mask)
    out_ref   : [BN, TT] f32   per-(n, t) smoothed loss
    """
    eps = label_smoothing
    # TODO(synk): on v6e/v7x bf16 inputs could keep max / subtract in bf16 and
    # only upcast at the exp input; kept in f32 here for cross-generation and
    # numerics parity.
    x = logit_ref[...].astype(jnp.float32)              # [BN, C, TT]
    tgt = target_ref[...]                                # [BN, TT] int32
    tmask = tmask_ref[...]                               # [BN, TT] f32
    wtgt = wtgt_ref[...]                                 # [BN, TT] f32
    wlm = wlm_ref[...]                                   # [1, C, 1] f32

    # Numerically stable log-softmax pieces over the class axis (axis=1).
    m = jnp.max(x, axis=1, keepdims=True)                # [BN, 1, TT]
    shifted = x - m                                      # [BN, C, TT]
    lse = jnp.log(jnp.sum(jnp.exp(shifted), axis=1))     # [BN, TT]

    # Single fused class reduction; logprobs / lpm are never materialized.
    # Note: a target outside [0, C) matches no one-hot column (nll gather -> 0
    # contribution from the sum term); PyTorch's gather would raise instead.
    col = jax.lax.broadcasted_iota(jnp.int32, x.shape, 1)
    is_tgt = (col == tgt[:, None, :]).astype(jnp.float32)      # [BN, C, TT]
    smooth_coef = (eps * inv_lm_sum) * tmask                    # [BN, TT]
    coef = wlm * ((1.0 - eps) * is_tgt + smooth_coef[:, None, :])
    s1 = jnp.sum(shifted * coef, axis=1)                        # [BN, TT]
    sum_wlm = jnp.sum(wlm)                                      # tiny reduction
    out_ref[...] = -s1 + lse * ((1.0 - eps) * wtgt + smooth_coef * sum_wlm)


def _round_up(x, m):
    return ((x + m - 1) // m) * m


def _vmem_config():
    """Generation-aware scoped-VMEM limit and a conservative tile budget."""
    try:
        cap = int(pltpu.get_tpu_info().vmem_capacity_bytes)
    except Exception:
        cap = 64 * 1024 * 1024          # assume the tightest case (v7x per-TC)
    # Scoped limit requested from Mosaic: above the 16/32 MiB defaults but with
    # headroom below physical VMEM (v7x has only 64 MiB per TensorCore).
    limit = max(16 << 20, min(cap * 3 // 4, 48 << 20))
    # Our own tile-size budget stays well under the requested limit.
    budget = int(limit * 0.75)
    return limit, budget


def _choose_tiles(n, c, t_len, elem_bytes, budget_bytes):
    """Pick (BN, TT).

    TT is always lane-dense (multiple of 128; ragged edges are masked by
    Pallas).  The VMEM estimate counts the double-buffered input block plus
    ~4 live f32 [BN,C,TT] intermediates plus the small [BN,TT] tensors.
    """
    def est(bn, tt):
        blk = bn * c * tt
        return blk * (2 * elem_bytes + 4 * 4) + 10 * bn * tt * 4

    tt = min(_round_up(t_len, 128), 512)
    bn = min(_round_up(n, 8), 64)
    while bn > 8 and est(bn, tt) > budget_bytes:
        bn -= 8
    while tt > 128 and est(bn, tt) > budget_bytes:
        tt -= 128
    # v7x shards "parallel" grid axes across its 2 TensorCores: avoid a (1,1)
    # grid when the problem can be split.
    if pl.cdiv(n, bn) == 1 and pl.cdiv(t_len, tt) == 1:
        if n > 8:
            bn = _round_up(pl.cdiv(n, 2), 8)
        elif t_len > 128:
            tt = _round_up(pl.cdiv(t_len, 2), 128)
    return bn, tt


def _per_element_losses(logit_nct, target_nt, tmask_nt, wtgt_nt, wlm,
                        label_smoothing, inv_lm_sum):
    """Returns the [N, T] matrix of per-(sample, timestep) losses."""
    n, c, t_len = logit_nct.shape
    vmem_limit, budget = _vmem_config()
    bn, tt = _choose_tiles(n, c, t_len, logit_nct.dtype.itemsize, budget)
    # TODO(synk): for vocabulary-scale C (where a full-C block no longer fits
    # VMEM, e.g. C~32k), add a C grid axis marked "arbitrary" with flash-style
    # running max/LSE accumulators in VMEM scratch instead of the full-C block.
    kernel = functools.partial(_loss_kernel, float(label_smoothing),
                               float(inv_lm_sum))
    return pl.pallas_call(
        kernel,
        out_shape=jax.ShapeDtypeStruct((n, t_len), jnp.float32),
        grid=(pl.cdiv(n, bn), pl.cdiv(t_len, tt)),
        in_specs=[
            pl.BlockSpec((bn, c, tt), lambda i, j: (i, 0, j)),   # logits tile
            pl.BlockSpec((bn, tt), lambda i, j: (i, j)),         # targets tile
            pl.BlockSpec((bn, tt), lambda i, j: (i, j)),         # target-mask tile
            pl.BlockSpec((bn, tt), lambda i, j: (i, j)),         # wlm gathered at target
            pl.BlockSpec((1, c, 1), lambda i, j: (0, 0, 0)),     # weight * logit_mask
        ],
        out_specs=pl.BlockSpec((bn, tt), lambda i, j: (i, j)),
        compiler_params=pltpu.CompilerParams(
            dimension_semantics=("parallel", "parallel"),
            vmem_limit_bytes=int(vmem_limit)),
    )(logit_nct, target_nt, tmask_nt, wtgt_nt, wlm)


def label_smoothing_cross_entropy_loss(logit, target, *, weight=None,
                                       ignore_indices=None, reduction="none",
                                       label_smoothing=0.0):
    """Mirrors LabelSmoothingCrossEntropyLoss.forward (PyTorch conventions)."""
    assert reduction in ["none", "mean_batch_prior", "mean_temporal_prior", "sum"]
    assert 0.0 <= label_smoothing <= 1.0
    if isinstance(ignore_indices, int):
        ignore_indices = [ignore_indices]

    logit = jnp.asarray(logit)
    target = jnp.asarray(target, jnp.int32)
    if logit.ndim == 2:
        logit = logit[..., None]
    if target.ndim == 1:
        target = target[..., None]
    assert logit.ndim == 3 and target.ndim == 2
    assert logit.shape[0] == target.shape[0]
    assert logit.shape[-1] == target.shape[-1]

    n, c, t_len = logit.shape

    # Static class mask / smoothing denominator (ignore_indices is a static
    # Python list, so 1/logit_mask.sum() is a compile-time constant).
    mask_np = np.ones((c,), np.float32)
    if ignore_indices is not None:
        mask_np[np.asarray(ignore_indices)] = 0.0
    lm_sum = float(mask_np.sum())
    # NOTE: if every class is ignored, inv_lm_sum = inf and the smooth term
    # NaNs — this matches the reference's 0/0 behavior.
    inv_lm_sum = (1.0 / lm_sum) if lm_sum > 0.0 else float("inf")

    w = (jnp.ones((c,), jnp.float32) if weight is None
         else jnp.asarray(weight, jnp.float32))
    wlm_vec = w * jnp.asarray(mask_np)                    # [C]
    wlm = wlm_vec.reshape(1, c, 1)
    # (weight * logit_mask) gathered at the target class — cheap wrapper-side
    # gather that lets the kernel avoid materializing per-class logprobs.
    wtgt = jnp.take(wlm_vec, target, axis=0)              # [N, T]

    if ignore_indices is not None:
        notin = ~(target[..., None] == jnp.asarray(ignore_indices, jnp.int32)).any(-1)
    else:
        notin = jnp.ones_like(target, dtype=bool)         # [N, T]
    tmask = notin.astype(jnp.float32)

    loss_nt = _per_element_losses(logit, target, tmask, wtgt, wlm,
                                  label_smoothing, inv_lm_sum)        # [N, T]

    if reduction == "mean_batch_prior":
        if ignore_indices is not None:
            denom = notin.sum(axis=0)                                 # [T]
        else:
            denom = jnp.full((t_len,), n)
        loss_nt = loss_nt / jnp.maximum(denom, 1).astype(jnp.float32)[None, :]

    loss = loss_nt.sum(axis=1)                                        # [N]  (sum over t)

    if reduction == "sum":
        loss = loss.sum()
    elif reduction == "mean_batch_prior":
        loss = loss.sum() / t_len
    elif reduction == "mean_temporal_prior":
        lengths = notin.sum(axis=1).astype(jnp.float32)               # [N]
        loss = (loss / jnp.clip(lengths, 1.0)).mean()
    return loss


def _reference_loss(logit, target, weight, ignore_indices, reduction, label_smoothing):
    """Pure-JAX reference mirroring the PyTorch code, for verification."""
    if isinstance(ignore_indices, int):
        ignore_indices = [ignore_indices]
    logit = jnp.asarray(logit)
    target = jnp.asarray(target, jnp.int32)
    if logit.ndim == 2:
        logit = logit[..., None]
    if target.ndim == 1:
        target = target[..., None]
    n, c, t_len = logit.shape
    ign = jnp.array(ignore_indices) if ignore_indices is not None else None
    logit_mask = jnp.ones((c,), jnp.float32)
    if ign is not None:
        logit_mask = logit_mask.at[ign].set(0.0)
    w = jnp.ones((c,), jnp.float32) if weight is None else jnp.asarray(weight, jnp.float32)

    total = jnp.zeros((n,), jnp.float32)
    for t in range(t_len):
        lt = logit[:, :, t].astype(jnp.float32)
        tt = target[:, t].astype(jnp.int32)
        lp = jax.nn.log_softmax(lt, axis=-1) * w * logit_mask
        nll = -jnp.take_along_axis(lp, tt[:, None], axis=-1)[:, 0]
        if ign is not None:
            tmask = (~(tt[:, None] == ign).any(-1)).astype(jnp.float32)
        else:
            tmask = jnp.ones((n,), jnp.float32)
        smooth = -lp.sum(-1) / logit_mask.sum() * tmask
        l = (1.0 - label_smoothing) * nll + label_smoothing * smooth
        if reduction == "mean_batch_prior":
            denom = tmask.sum() if ign is not None else float(n)
            l = l / jnp.maximum(denom, 1.0)
        total = total + l

    if reduction == "sum":
        return total.sum()
    if reduction == "mean_batch_prior":
        return total.sum() / t_len
    if reduction == "mean_temporal_prior":
        if ign is not None:
            lengths = (~(target[..., None].astype(jnp.int32) == ign).any(-1)).sum(-1)
        else:
            lengths = jnp.full((n,), t_len)
        return (total / jnp.clip(lengths.astype(jnp.float32), 1.0)).mean()
    return total


if __name__ == "__main__":
    key = jax.random.PRNGKey(0)
    k1, k2, k3, k4 = jax.random.split(key, 4)

    N, C, T = 8, 32, 16
    logit = jax.random.normal(k1, (N, C, T), jnp.float32)        # PyTorch layout [N, C, T]
    target = jax.random.randint(k2, (N, T), 0, C)                # [N, T]
    class_weight = 0.5 + jnp.arange(C, dtype=jnp.float32) / (C - 1)

    cfg = dict(weight=class_weight, ignore_indices=[0], label_smoothing=0.1)

    results = {}
    for red in ["none", "sum", "mean_batch_prior", "mean_temporal_prior"]:
        results[red] = label_smoothing_cross_entropy_loss(logit, target,
                                                          reduction=red, **cfg)
    # 2-D path ([N, C] logits, [N] targets), no weight / ignore.
    logit2d = jax.random.normal(k3, (N, C), jnp.float32)
    target1d = jax.random.randint(k4, (N,), 0, C)
    res_2d = label_smoothing_cross_entropy_loss(logit2d, target1d,
                                                reduction="sum", label_smoothing=0.2)
    jax.block_until_ready((results, res_2d))

    for red, val in results.items():
        ref = _reference_loss(logit, target, class_weight, [0], red, 0.1)
        assert jnp.allclose(val, ref, rtol=1e-4, atol=1e-4), (red, val, ref)
    ref_2d = _reference_loss(logit2d, target1d, None, None, "sum", 0.2)
    assert jnp.allclose(res_2d, ref_2d, rtol=1e-4, atol=1e-4), (res_2d, ref_2d)

    print("KERNEL_OK")
</pallas_src>

<mosaic_0001>
module attributes {stable_mosaic.version = 11 : i64} {
  func.func @_loss_kernel(%arg0: i32, %arg1: i32, %arg2: memref<8x32x128xf32, #tpu.memory_space<vmem>>, %arg3: memref<8x128xi32, #tpu.memory_space<vmem>>, %arg4: memref<8x128xf32, #tpu.memory_space<vmem>>, %arg5: memref<8x128xf32, #tpu.memory_space<vmem>>, %arg6: memref<1x32x1xf32, #tpu.memory_space<vmem>>, %arg7: memref<8x128xf32, #tpu.memory_space<vmem>>) attributes {dimension_semantics = [#tpu.dimension_semantics<parallel>, #tpu.dimension_semantics<parallel>], iteration_bounds = array<i64: 1, 1>, scalar_prefetch = 0 : i64, scratch_operands = 0 : i64, tpu.core_type = #tpu.core_type<tc>, window_params = [{transform_indices = @transform_0, window_bounds = array<i64: 8, 32, 128>}, {transform_indices = @transform_1, window_bounds = array<i64: 8, 128>}, {transform_indices = @transform_2, window_bounds = array<i64: 8, 128>}, {transform_indices = @transform_3, window_bounds = array<i64: 8, 128>}, {pipeline_mode = #tpu.pipeline_mode<synchronous>, transform_indices = @transform_4, window_bounds = array<i64: 1, 32, 1>}, {transform_indices = @transform_5, window_bounds = array<i64: 8, 128>}]} {
    %c0 = arith.constant 0 : index
    %c0_0 = arith.constant 0 : index
    %c0_1 = arith.constant 0 : index
    %0 = vector.load %arg2[%c0, %c0_0, %c0_1] : memref<8x32x128xf32, #tpu.memory_space<vmem>>, vector<8x32x128xf32>
    %c0_2 = arith.constant 0 : index
    %c0_3 = arith.constant 0 : index
    %1 = vector.load %arg3[%c0_2, %c0_3] : memref<8x128xi32, #tpu.memory_space<vmem>>, vector<8x128xi32>
    %c0_4 = arith.constant 0 : index
    %c0_5 = arith.constant 0 : index
    %2 = vector.load %arg4[%c0_4, %c0_5] : memref<8x128xf32, #tpu.memory_space<vmem>>, vector<8x128xf32>
    %c0_6 = arith.constant 0 : index
    %c0_7 = arith.constant 0 : index
    %3 = vector.load %arg5[%c0_6, %c0_7] : memref<8x128xf32, #tpu.memory_space<vmem>>, vector<8x128xf32>
    %c0_8 = arith.constant 0 : index
    %c0_9 = arith.constant 0 : index
    %c0_10 = arith.constant 0 : index
    %4 = vector.load %arg6[%c0_8, %c0_9, %c0_10] : memref<1x32x1xf32, #tpu.memory_space<vmem>>, vector<1x32x1xf32>
    %cst = arith.constant dense<0xFF800000> : vector<8x128xf32>
    %5 = vector.multi_reduction <maximumf>, %0, %cst [1] : vector<8x32x128xf32> to vector<8x128xf32>
    %6 = vector.shape_cast %5 : vector<8x128xf32> to vector<8x1x128xf32>
    %7 = vector.broadcast %6 : vector<8x1x128xf32> to vector<8x32x128xf32>
    %8 = arith.subf %0, %7 : vector<8x32x128xf32>
    %9 = math.exp %8 : vector<8x32x128xf32>
    %cst_11 = arith.constant dense<0.000000e+00> : vector<8x128xf32>
    %10 = vector.multi_reduction <add>, %9, %cst_11 [1] : vector<8x32x128xf32> to vector<8x128xf32>
    %11 = math.log %10 : vector<8x128xf32>
    %12 = tpu.iota {dimensions = array<i32: 1>} : vector<8x32x128xi32>
    %13 = vector.shape_cast %1 : vector<8x128xi32> to vector<8x1x128xi32>
    %14 = vector.broadcast %13 : vector<8x1x128xi32> to vector<8x32x128xi32>
    %15 = arith.cmpi eq, %12, %14 : vector<8x32x128xi32>
    %16 = arith.extui %15 : vector<8x32x128xi1> to vector<8x32x128xi32>
    %17 = arith.sitofp %16 : vector<8x32x128xi32> to vector<8x32x128xf32>
    %cst_12 = arith.constant 0.0032258064 : f32
    %18 = vector.broadcast %cst_12 : f32 to vector<8x128xf32>
    %19 = arith.mulf %18, %2 : vector<8x128xf32>
    %cst_13 = arith.constant 0.899999976 : f32
    %20 = vector.broadcast %cst_13 : f32 to vector<8x32x128xf32>
    %21 = arith.mulf %20, %17 : vector<8x32x128xf32>
    %22 = vector.shape_cast %19 : vector<8x128xf32> to vector<8x1x128xf32>
    %23 = vector.broadcast %22 : vector<8x1x128xf32> to vector<8x32x128xf32>
    %24 = arith.addf %21, %23 : vector<8x32x128xf32>
    %25 = vector.broadcast %4 : vector<1x32x1xf32> to vector<8x32x128xf32>
    %26 = arith.mulf %25, %24 : vector<8x32x128xf32>
    %27 = arith.mulf %8, %26 : vector<8x32x128xf32>
    %cst_14 = arith.constant dense<0.000000e+00> : vector<8x128xf32>
    %28 = vector.multi_reduction <add>, %27, %cst_14 [1] : vector<8x32x128xf32> to vector<8x128xf32>
    %29 = vector.shape_cast %4 : vector<1x32x1xf32> to vector<1x1x32x1xf32>
    %cst_15 = arith.constant dense<0.000000e+00> : vector<1xf32>
    %30 = vector.multi_reduction <add>, %29, %cst_15 [1, 2, 3] : vector<1x1x32x1xf32> to vector<1xf32>
    %31 = vector.shape_cast %30 : vector<1xf32> to vector<1x1x1x1xf32>
    %32 = vector.extract %31[0, 0, 0, 0] : f32 from vector<1x1x1x1xf32>
    %cst_16 = arith.constant 0.000000e+00 : f32
    %33 = vector.broadcast %cst_16 : f32 to vector<8x128xf32>
    %34 = arith.subf %33, %28 : vector<8x128xf32>
    %cst_17 = arith.constant 0.899999976 : f32
    %35 = vector.broadcast %cst_17 : f32 to vector<8x128xf32>
    %36 = arith.mulf %35, %3 : vector<8x128xf32>
    %37 = vector.broadcast %32 : f32 to vector<8x128xf32>
    %38 = arith.mulf %19, %37 : vector<8x128xf32>
    %39 = arith.addf %36, %38 : vector<8x128xf32>
    %40 = arith.mulf %11, %39 : vector<8x128xf32>
    %41 = arith.addf %34, %40 : vector<8x128xf32>
    %c0_18 = arith.constant 0 : index
    %c0_19 = arith.constant 0 : index
    %42 = vector.load %arg7[%c0_18, %c0_19] : memref<8x128xf32, #tpu.memory_space<vmem>>, vector<8x128xf32>
    tpu.vector_store %arg7[%c0_18, %c0_19], %41 {strides = array<i32>} : memref<8x128xf32, #tpu.memory_space<vmem>>, vector<8x128xf32>,
    return
  }
  func.func @transform_0(%arg0: i32, %arg1: i32) -> (i32, i32, i32) {
    %c0_i32 = arith.constant 0 : i32
    %c0_i32_0 = arith.constant 0 : i32
    return %arg0, %c0_i32, %arg1 : i32, i32, i32
  }
  func.func @transform_1(%arg0: i32, %arg1: i32) -> (i32, i32) {
    %c0_i32 = arith.constant 0 : i32
    return %arg0, %arg1 : i32, i32
  }
  func.func @transform_2(%arg0: i32, %arg1: i32) -> (i32, i32) {
    %c0_i32 = arith.constant 0 : i32
    return %arg0, %arg1 : i32, i32
  }
  func.func @transform_3(%arg0: i32, %arg1: i32) -> (i32, i32) {
    %c0_i32 = arith.constant 0 : i32
    return %arg0, %arg1 : i32, i32
  }
  func.func @transform_4(%arg0: i32, %arg1: i32) -> (i32, i32, i32) {
    %c0_i32 = arith.constant 0 : i32
    %c0_i32_0 = arith.constant 0 : i32
    %c0_i32_1 = arith.constant 0 : i32
    %c0_i32_2 = arith.constant 0 : i32
    return %c0_i32, %c0_i32_0, %c0_i32_1 : i32, i32, i32
  }
  func.func @transform_5(%arg0: i32, %arg1: i32) -> (i32, i32) {
    %c0_i32 = arith.constant 0 : i32
    return %arg0, %arg1 : i32, i32
  }
}

</mosaic_0001>

<llo_original>
// kernel: tpu_custom_call.1
$region0: #{tpu_custom_call.1}
  #allocation0 [shape = 'u32[]', space=smem, size = 0x4, offset = 0x4, fixed_abs, tag = 'smem constant byte address 0x4 - core index']
  #allocation1 [shape = 'u32[72,128]{1,0:T(1,128)}', space=vmem, size = 0x9000, scoped, tag = 'internal scratch']
  %s0 = inlined_call_operand.vmem [shape: f32[8,32,16], index: 0, kind: input, shape index: {}]
  %s1 = inlined_call_operand.vmem [shape: s32[8,16], index: 1, kind: input, shape index: {}]
  %s2 = inlined_call_operand.vmem [shape: f32[8,16], index: 2, kind: input, shape index: {}]
  %s3 = inlined_call_operand.vmem [shape: f32[8,16], index: 3, kind: input, shape index: {}]
  %s4 = inlined_call_operand.vmem [shape: f32[1,32,1], index: 4, kind: input, shape index: {}]
  %s5 = inlined_call_operand.hbm [shape: f32[8,16], index: 5, kind: output, shape index: {}]
  %s6 = sld [smem:[#allocation0]]
  $region30: #{tpu_custom_call.1} parent=0
    _
  %s8 = ssub.s32 1, %s6
  %s9 = scalar_select 0, %s8, %s6
  $region1: #{tpu_custom_call.1} parent=0
    #allocation2 [shape = 'u8[4096]{0}', space=vmem, size = 0x1000, scoped, tag = 'output window, operand 0, single buffered']
    #allocation3 [shape = 's32[1]{0}', space=sflag, size = 0x4, scoped, tag = 'scoped memory for tpu_custom_call.1']
    %10 = vsyncpa [#allocation3], 0
    // Predicated region
    $region2: #{tpu_custom_call.1} parent=1 // pred_check
      _
    $region3: #{tpu_custom_call.1} parent=1 // pred_check_branch
      %12 = sbr.rel (0) target = $region5
    $region4: #{tpu_custom_call.1} parent=1 // pred_region
      _
    $region5: #{tpu_custom_call.1} parent=1 // pred_fallthru
      _
    // Predicated region
    $region6: #{tpu_custom_call.1} parent=1 // pred_check
      _
    $region7: #{tpu_custom_call.1} parent=1 // pred_check_branch
      %14 = sbr.rel (0) target = $region9
    $region8: #{tpu_custom_call.1} parent=1 // pred_region
      _
    $region9: #{tpu_custom_call.1} parent=1 // pred_fallthru
      _
    // Predicated region
    $region10: #{tpu_custom_call.1} parent=1 // pred_check
      _
    $region11: #{tpu_custom_call.1} parent=1 // pred_check_branch
      %16 = sbr.rel (0) target = $region13
    $region12: #{tpu_custom_call.1} parent=1 // pred_region
      _
    $region13: #{tpu_custom_call.1} parent=1 // pred_fallthru
      _
    // Predicated region
    $region14: #{tpu_custom_call.1} parent=1 // pred_check
      _
    $region15: #{tpu_custom_call.1} parent=1 // pred_check_branch
      %18 = sbr.rel (0) target = $region17
    $region16: #{tpu_custom_call.1} parent=1 // pred_region
      _
    $region17: #{tpu_custom_call.1} parent=1 // pred_fallthru
      _
    // Predicated region
    $region18: #{tpu_custom_call.1} parent=1 // pred_check
      _
    $region19: #{tpu_custom_call.1} parent=1 // pred_check_branch
      %20 = sbr.rel (0) target = $region21
    $region20: #{tpu_custom_call.1} parent=1 // pred_region
      _
    $region21: #{tpu_custom_call.1} parent=1 // pred_fallthru
      _
    %v21 = vld [vmem:[%s0] sm:$0xff]
    %v22 = vld [vmem:[%s0 + $0x8] sm:$0xff]
    %v23 = vld [vmem:[%s0 + $0x10] sm:$0xff]
    %v24 = vld [vmem:[%s0 + $0x18] sm:$0xff]
    %v25 = vld [vmem:[%s0 + $0x20] sm:$0xff]
    %v26 = vld [vmem:[%s0 + $0x28] sm:$0xff]
    %v27 = vld [vmem:[%s0 + $0x30] sm:$0xff]
    %v28 = vld [vmem:[%s0 + $0x38] sm:$0xff]
    %v29 = vld [vmem:[%s0 + $0x40] sm:$0xff]
    %v30 = vld [vmem:[%s0 + $0x48] sm:$0xff]
    %v31 = vld [vmem:[%s0 + $0x50] sm:$0xff]
    %v32 = vld [vmem:[%s0 + $0x58] sm:$0xff]
    %v33 = vld [vmem:[%s0 + $0x60] sm:$0xff]
    %v34 = vld [vmem:[%s0 + $0x68] sm:$0xff]
    %v35 = vld [vmem:[%s0 + $0x70] sm:$0xff]
    %v36 = vld [vmem:[%s0 + $0x78] sm:$0xff]
    %v37 = vld [vmem:[%s0 + $0x80] sm:$0xff]
    %v38 = vld [vmem:[%s0 + $0x88] sm:$0xff]
    %v39 = vld [vmem:[%s0 + $0x90] sm:$0xff]
    %v40 = vld [vmem:[%s0 + $0x98] sm:$0xff]
    %v41 = vld [vmem:[%s0 + $0xa0] sm:$0xff]
    %v42 = vld [vmem:[%s0 + $0xa8] sm:$0xff]
    %v43 = vld [vmem:[%s0 + $0xb0] sm:$0xff]
    %v44 = vld [vmem:[%s0 + $0xb8] sm:$0xff]
    %v45 = vld [vmem:[%s0 + $0xc0] sm:$0xff]
    %v46 = vld [vmem:[%s0 + $0xc8] sm:$0xff]
    %v47 = vld [vmem:[%s0 + $0xd0] sm:$0xff]
    %v48 = vld [vmem:[%s0 + $0xd8] sm:$0xff]
    %v49 = vld [vmem:[%s0 + $0xe0] sm:$0xff]
    %v50 = vld [vmem:[%s0 + $0xe8] sm:$0xff]
    %v51 = vld [vmem:[%s0 + $0xf0] sm:$0xff]
    %v52 = vld [vmem:[%s0 + $0xf8] sm:$0xff]
    %v53 = vld [vmem:[%s1] sm:$0xff]
    %v54 = vld [vmem:[%s2] sm:$0xff]
    %v55 = vld [vmem:[%s3] sm:$0xff]
    %v56 = vld [vmem:[%s4] sm:$0xff]
    %v57 = vld [vmem:[%s4 + $0x8] sm:$0xff]
    %v58 = vld [vmem:[%s4 + $0x10] sm:$0xff]
    %v59 = vld [vmem:[%s4 + $0x18] sm:$0xff]
    %v60 = vmax.f32 %v21, %v22
    %v61 = vmax.f32 %v60, %v23
    %v62 = vmax.f32 %v61, %v24
    %v63 = vrot.slane %v62, 4
    %v64 = vmax.f32 %v62, %v63
    %v65 = vrot.slane %v64, 2
    %v66 = vmax.f32 %v64, %v65
    %v67 = vrot.slane %v66, 1
    %v68 = vmax.f32 %v66, %v67
    %v69 = vmax.f32 %v25, %v26
    %v70 = vmax.f32 %v69, %v27
    %v71 = vmax.f32 %v70, %v28
    %v72 = vrot.slane %v71, 4
    %v73 = vmax.f32 %v71, %v72
    %v74 = vrot.slane %v73, 2
    %v75 = vmax.f32 %v73, %v74
    %v76 = vrot.slane %v75, 1
    %v77 = vmax.f32 %v75, %v76
    %v78 = vmax.f32 %v29, %v30
    %v79 = vmax.f32 %v78, %v31
    %v80 = vmax.f32 %v79, %v32
    %v81 = vrot.slane %v80, 4
    %v82 = vmax.f32 %v80, %v81
    %v83 = vrot.slane %v82, 2
    %v84 = vmax.f32 %v82, %v83
    %v85 = vrot.slane %v84, 1
    %v86 = vmax.f32 %v84, %v85
    %v87 = vmax.f32 %v33, %v34
    %v88 = vmax.f32 %v87, %v35
    %v89 = vmax.f32 %v88, %v36
    %v90 = vrot.slane %v89, 4
    %v91 = vmax.f32 %v89, %v90
    %v92 = vrot.slane %v91, 2
    %v93 = vmax.f32 %v91, %v92
    %v94 = vrot.slane %v93, 1
    %v95 = vmax.f32 %v93, %v94
    %v96 = vmax.f32 %v37, %v38
    %v97 = vmax.f32 %v96, %v39
    %v98 = vmax.f32 %v97, %v40
    %v99 = vrot.slane %v98, 4
    %v100 = vmax.f32 %v98, %v99
    %v101 = vrot.slane %v100, 2
    %v102 = vmax.f32 %v100, %v101
    %v103 = vrot.slane %v102, 1
    %v104 = vmax.f32 %v102, %v103
    %v105 = vmax.f32 %v41, %v42
    %v106 = vmax.f32 %v105, %v43
    %v107 = vmax.f32 %v106, %v44
    %v108 = vrot.slane %v107, 4
    %v109 = vmax.f32 %v107, %v108
    %v110 = vrot.slane %v109, 2
    %v111 = vmax.f32 %v109, %v110
    %v112 = vrot.slane %v111, 1
    %v113 = vmax.f32 %v111, %v112
    %v114 = vmax.f32 %v45, %v46
    %v115 = vmax.f32 %v114, %v47
    %v116 = vmax.f32 %v115, %v48
    %v117 = vrot.slane %v116, 4
    %v118 = vmax.f32 %v116, %v117
    %v119 = vrot.slane %v118, 2
    %v120 = vmax.f32 %v118, %v119
    %v121 = vrot.slane %v120, 1
    %v122 = vmax.f32 %v120, %v121
    %v123 = vmax.f32 %v49, %v50
    %v124 = vmax.f32 %v123, %v51
    %v125 = vmax.f32 %v124, %v52
    %v126 = vrot.slane %v125, 4
    %v127 = vmax.f32 %v125, %v126
    %v128 = vrot.slane %v127, 2
    %v129 = vmax.f32 %v127, %v128
    %v130 = vrot.slane %v129, 1
    %v131 = vmax.f32 %v129, %v130
    %v132 = vsub.f32 %v21, %v68
    %v133 = vsub.f32 %v22, %v68
    %v134 = vsub.f32 %v23, %v68
    %v135 = vsub.f32 %v24, %v68
    %v136 = vsub.f32 %v25, %v77
    %v137 = vsub.f32 %v26, %v77
    %v138 = vsub.f32 %v27, %v77
    %v139 = vsub.f32 %v28, %v77
    %v140 = vsub.f32 %v29, %v86
    %v141 = vsub.f32 %v30, %v86
    %v142 = vsub.f32 %v31, %v86
    %v143 = vsub.f32 %v32, %v86
    %v144 = vsub.f32 %v33, %v95
    %v145 = vsub.f32 %v34, %v95
    %v146 = vsub.f32 %v35, %v95
    %v147 = vsub.f32 %v36, %v95
    %v148 = vsub.f32 %v37, %v104
    %v149 = vsub.f32 %v38, %v104
    %v150 = vsub.f32 %v39, %v104
    %v151 = vsub.f32 %v40, %v104
    %v152 = vsub.f32 %v41, %v113
    %v153 = vsub.f32 %v42, %v113
    %v154 = vsub.f32 %v43, %v113
    %v155 = vsub.f32 %v44, %v113
    %v156 = vsub.f32 %v45, %v122
    %v157 = vsub.f32 %v46, %v122
    %v158 = vsub.f32 %v47, %v122
    %v159 = vsub.f32 %v48, %v122
    %v160 = vsub.f32 %v49, %v131
    %v161 = vsub.f32 %v50, %v131
    %v162 = vsub.f32 %v51, %v131
    %v163 = vsub.f32 %v52, %v131
    %v164 = vmul.f32 %v132, 1.442695
    %v165 = vpow.pop %v164
    %v166 = vmul.f32 %v133, 1.442695
    %v167 = vpow.pop %v166
    %v168 = vmul.f32 %v134, 1.442695
    %v169 = vpow.pop %v168
    %v170 = vmul.f32 %v135, 1.442695
    %v171 = vpow.pop %v170
    %v172 = vmul.f32 %v136, 1.442695
    %v173 = vpow.pop %v172
    %v174 = vmul.f32 %v137, 1.442695
    %v175 = vpow.pop %v174
    %v176 = vmul.f32 %v138, 1.442695
    %v177 = vpow.pop %v176
    %v178 = vmul.f32 %v139, 1.442695
    %v179 = vpow.pop %v178
    %v180 = vmul.f32 %v140, 1.442695
    %v181 = vpow.pop %v180
    %v182 = vmul.f32 %v141, 1.442695
    %v183 = vpow.pop %v182
    %v184 = vmul.f32 %v142, 1.442695
    %v185 = vpow.pop %v184
    %v186 = vmul.f32 %v143, 1.442695
    %v187 = vpow.pop %v186
    %v188 = vmul.f32 %v144, 1.442695
    %v189 = vpow.pop %v188
    %v190 = vmul.f32 %v145, 1.442695
    %v191 = vpow.pop %v190
    %v192 = vmul.f32 %v146, 1.442695
    %v193 = vpow.pop %v192
    %v194 = vmul.f32 %v147, 1.442695
    %v195 = vpow.pop %v194
    %v196 = vmul.f32 %v148, 1.442695
    %v197 = vpow.pop %v196
    %v198 = vmul.f32 %v149, 1.442695
    %v199 = vpow.pop %v198
    %v200 = vmul.f32 %v150, 1.442695
    %v201 = vpow.pop %v200
    %v202 = vmul.f32 %v151, 1.442695
    %v203 = vpow.pop %v202
    %v204 = vmul.f32 %v152, 1.442695
    %v205 = vpow.pop %v204
    %v206 = vmul.f32 %v153, 1.442695
    %v207 = vpow.pop %v206
    %v208 = vmul.f32 %v154, 1.442695
    %v209 = vpow.pop %v208
    %v210 = vmul.f32 %v155, 1.442695
    %v211 = vpow.pop %v210
    %v212 = vmul.f32 %v156, 1.442695
    %v213 = vpow.pop %v212
    %v214 = vmul.f32 %v157, 1.442695
    %v215 = vpow.pop %v214
    %v216 = vmul.f32 %v158, 1.442695
    %v217 = vpow.pop %v216
    %v218 = vmul.f32 %v159, 1.442695
    %v219 = vpow.pop %v218
    %v220 = vmul.f32 %v160, 1.442695
    %v221 = vpow.pop %v220
    %v222 = vmul.f32 %v161, 1.442695
    %v223 = vpow.pop %v222
    %v224 = vmul.f32 %v162, 1.442695
    %v225 = vpow.pop %v224
    %v226 = vmul.f32 %v163, 1.442695
    %v227 = vpow.pop %v226
    %v228 = vadd.f32 %v165, %v167
    %v229 = vadd.f32 %v228, %v169
    %v230 = vadd.f32 %v229, %v171
    %v231 = vrot.slane %v230, 4
    %v232 = vadd.f32 %v230, %v231
    %v233 = vrot.slane %v232, 2
    %v234 = vadd.f32 %v232, %v233
    %v235 = vrot.slane %v234, 1
    %v236 = vadd.f32 %v234, %v235
    %v237 = vadd.f32 %v173, %v175
    %v238 = vadd.f32 %v237, %v177
    %v239 = vadd.f32 %v238, %v179
    %v240 = vrot.slane %v239, 4
    %v241 = vadd.f32 %v239, %v240
    %v242 = vrot.slane %v241, 2
    %v243 = vadd.f32 %v241, %v242
    %v244 = vrot.slane %v243, 1
    %v245 = vadd.f32 %v243, %v244
    %v246 = vadd.f32 %v181, %v183
    %v247 = vadd.f32 %v246, %v185
    %v248 = vadd.f32 %v247, %v187
    %v249 = vrot.slane %v248, 4
    %v250 = vadd.f32 %v248, %v249
    %v251 = vrot.slane %v250, 2
    %v252 = vadd.f32 %v250, %v251
    %v253 = vrot.slane %v252, 1
    %v254 = vadd.f32 %v252, %v253
    %v255 = vadd.f32 %v189, %v191
    %v256 = vadd.f32 %v255, %v193
    %v257 = vadd.f32 %v256, %v195
    %v258 = vrot.slane %v257, 4
    %v259 = vadd.f32 %v257, %v258
    %v260 = vrot.slane %v259, 2
    %v261 = vadd.f32 %v259, %v260
    %v262 = vrot.slane %v261, 1
    %v263 = vadd.f32 %v261, %v262
    %v264 = vadd.f32 %v197, %v199
    %v265 = vadd.f32 %v264, %v201
    %v266 = vadd.f32 %v265, %v203
    %v267 = vrot.slane %v266, 4
    %v268 = vadd.f32 %v266, %v267
    %v269 = vrot.slane %v268, 2
    %v270 = vadd.f32 %v268, %v269
    %v271 = vrot.slane %v270, 1
    %v272 = vadd.f32 %v270, %v271
    %v273 = vadd.f32 %v205, %v207
    %v274 = vadd.f32 %v273, %v209
    %v275 = vadd.f32 %v274, %v211
    %v276 = vrot.slane %v275, 4
    %v277 = vadd.f32 %v275, %v276
    %v278 = vrot.slane %v277, 2
    %v279 = vadd.f32 %v277, %v278
    %v280 = vrot.slane %v279, 1
    %v281 = vadd.f32 %v279, %v280
    %v282 = vadd.f32 %v213, %v215
    %v283 = vadd.f32 %v282, %v217
    %v284 = vadd.f32 %v283, %v219
    %v285 = vrot.slane %v284, 4
    %v286 = vadd.f32 %v284, %v285
    %v287 = vrot.slane %v286, 2
    %v288 = vadd.f32 %v286, %v287
    %v289 = vrot.slane %v288, 1
    %v290 = vadd.f32 %v288, %v289
    %v291 = vadd.f32 %v221, %v223
    %v292 = vadd.f32 %v291, %v225
    %v293 = vadd.f32 %v292, %v227
    %v294 = vrot.slane %v293, 4
    %v295 = vadd.f32 %v293, %v294
    %v296 = vrot.slane %v295, 2
    %v297 = vadd.f32 %v295, %v296
    %v298 = vrot.slane %v297, 1
    %v299 = vadd.f32 %v297, %v298
    %v300 = vlog2.pop %v236
    %v301 = vmul.f32 %v300, 0.6931472
    %v302 = vlog2.pop %v245
    %v303 = vmul.f32 %v302, 0.6931472
    %v304 = vlog2.pop %v254
    %v305 = vmul.f32 %v304, 0.6931472
    %v306 = vlog2.pop %v263
    %v307 = vmul.f32 %v306, 0.6931472
    %v308 = vlog2.pop %v272
    %v309 = vmul.f32 %v308, 0.6931472
    %v310 = vlog2.pop %v281
    %v311 = vmul.f32 %v310, 0.6931472
    %v312 = vlog2.pop %v290
    %v313 = vmul.f32 %v312, 0.6931472
    %v314 = vlog2.pop %v299
    %v315 = vmul.f32 %v314, 0.6931472
    %v316 = vlaneseq
    %v317 = vshrl.u32 %v316, 7
    %v318 = vadd.s32 %v317, 8
    %v319 = vadd.s32 %v317, 16
    %v320 = vadd.s32 %v317, 24
    %v321 = vrot.slane %v53, 1
    %v322 = vrot.slane %v53, 2
    %v323 = vrot.slane %v53, 3
    %v324 = vrot.slane %v53, 4
    %v325 = vrot.slane %v53, 5
    %v326 = vrot.slane %v53, 6
    %v327 = vrot.slane %v53, 7
    %v328 = vperm.slane %v53, 0
    %v329 = vperm.slane %v321, 0
    %v330 = vperm.slane %v322, 0
    %v331 = vperm.slane %v323, 0
    %v332 = vperm.slane %v324, 0
    %v333 = vperm.slane %v325, 0
    %v334 = vperm.slane %v326, 0
    %v335 = vperm.slane %v327, 0
    %vm336 = vcmp.eq.s32.totalorder %v317, %v328
    %vm337 = vcmp.eq.s32.totalorder %v318, %v328
    %vm338 = vcmp.eq.s32.totalorder %v319, %v328
    %vm339 = vcmp.eq.s32.totalorder %v320, %v328
    %vm340 = vcmp.eq.s32.totalorder %v317, %v329
    %vm341 = vcmp.eq.s32.totalorder %v318, %v329
    %vm342 = vcmp.eq.s32.totalorder %v319, %v329
    %vm343 = vcmp.eq.s32.totalorder %v320, %v329
    %vm344 = vcmp.eq.s32.totalorder %v317, %v330
    %vm345 = vcmp.eq.s32.totalorder %v318, %v330
    %vm346 = vcmp.eq.s32.totalorder %v319, %v330
    %vm347 = vcmp.eq.s32.totalorder %v320, %v330
    %vm348 = vcmp.eq.s32.totalorder %v317, %v331
    %vm349 = vcmp.eq.s32.totalorder %v318, %v331
    %vm350 = vcmp.eq.s32.totalorder %v319, %v331
    %vm351 = vcmp.eq.s32.totalorder %v320, %v331
    %vm352 = vcmp.eq.s32.totalorder %v317, %v332
    %vm353 = vcmp.eq.s32.totalorder %v318, %v332
    %vm354 = vcmp.eq.s32.totalorder %v319, %v332
    %vm355 = vcmp.eq.s32.totalorder %v320, %v332
    %vm356 = vcmp.eq.s32.totalorder %v317, %v333
    %vm357 = vcmp.eq.s32.totalorder %v318, %v333
    %vm358 = vcmp.eq.s32.totalorder %v319, %v333
    %vm359 = vcmp.eq.s32.totalorder %v320, %v333
    %vm360 = vcmp.eq.s32.totalorder %v317, %v334
    %vm361 = vcmp.eq.s32.totalorder %v318, %v334
    %vm362 = vcmp.eq.s32.totalorder %v319, %v334
    %vm363 = vcmp.eq.s32.totalorder %v320, %v334
    %vm364 = vcmp.eq.s32.totalorder %v317, %v335
    %vm365 = vcmp.eq.s32.totalorder %v318, %v335
    %vm366 = vcmp.eq.s32.totalorder %v319, %v335
    %vm367 = vcmp.eq.s32.totalorder %v320, %v335
    %v368 = vsel %vm336, 1, 0
    %v369 = vsel %vm337, 1, 0
    %v370 = vsel %vm338, 1, 0
    %v371 = vsel %vm339, 1, 0
    %v372 = vsel %vm340, 1, 0
    %v373 = vsel %vm341, 1, 0
    %v374 = vsel %vm342, 1, 0
    %v375 = vsel %vm343, 1, 0
    %v376 = vsel %vm344, 1, 0
    %v377 = vsel %vm345, 1, 0
    %v378 = vsel %vm346, 1, 0
    %v379 = vsel %vm347, 1, 0
    %v380 = vsel %vm348, 1, 0
    %v381 = vsel %vm349, 1, 0
    %v382 = vsel %vm350, 1, 0
    %v383 = vsel %vm351, 1, 0
    %v384 = vsel %vm352, 1, 0
    %v385 = vsel %vm353, 1, 0
    %v386 = vsel %vm354, 1, 0
    %v387 = vsel %vm355, 1, 0
    %v388 = vsel %vm356, 1, 0
    %v389 = vsel %vm357, 1, 0
    %v390 = vsel %vm358, 1, 0
    %v391 = vsel %vm359, 1, 0
    %v392 = vsel %vm360, 1, 0
    %v393 = vsel %vm361, 1, 0
    %v394 = vsel %vm362, 1, 0
    %v395 = vsel %vm363, 1, 0
    %v396 = vsel %vm364, 1, 0
    %v397 = vsel %vm365, 1, 0
    %v398 = vsel %vm366, 1, 0
    %v399 = vsel %vm367, 1, 0
    %v400 = vcvt.s32.f32 %v368
    %v401 = vcvt.s32.f32 %v369
    %v402 = vcvt.s32.f32 %v370
    %v403 = vcvt.s32.f32 %v371
    %v404 = vcvt.s32.f32 %v372
    %v405 = vcvt.s32.f32 %v373
    %v406 = vcvt.s32.f32 %v374
    %v407 = vcvt.s32.f32 %v375
    %v408 = vcvt.s32.f32 %v376
    %v409 = vcvt.s32.f32 %v377
    %v410 = vcvt.s32.f32 %v378
    %v411 = vcvt.s32.f32 %v379
    %v412 = vcvt.s32.f32 %v380
    %v413 = vcvt.s32.f32 %v381
    %v414 = vcvt.s32.f32 %v382
    %v415 = vcvt.s32.f32 %v383
    %v416 = vcvt.s32.f32 %v384
    %v417 = vcvt.s32.f32 %v385
    %v418 = vcvt.s32.f32 %v386
    %v419 = vcvt.s32.f32 %v387
    %v420 = vcvt.s32.f32 %v388
    %v421 = vcvt.s32.f32 %v389
    %v422 = vcvt.s32.f32 %v390
    %v423 = vcvt.s32.f32 %v391
    %v424 = vcvt.s32.f32 %v392
    %v425 = vcvt.s32.f32 %v393
    %v426 = vcvt.s32.f32 %v394
    %v427 = vcvt.s32.f32 %v395
    %v428 = vcvt.s32.f32 %v396
    %v429 = vcvt.s32.f32 %v397
    %v430 = vcvt.s32.f32 %v398
    %v431 = vcvt.s32.f32 %v399
    %v432 = vmul.f32 %v54, 0.0032258064
    %v433 = vmul.f32 %v400, 0.9
    %v434 = vmul.f32 %v401, 0.9
    %v435 = vmul.f32 %v402, 0.9
    %v436 = vmul.f32 %v403, 0.9
    %v437 = vmul.f32 %v404, 0.9
    %v438 = vmul.f32 %v405, 0.9
    %v439 = vmul.f32 %v406, 0.9
    %v440 = vmul.f32 %v407, 0.9
    %v441 = vmul.f32 %v408, 0.9
    %v442 = vmul.f32 %v409, 0.9
    %v443 = vmul.f32 %v410, 0.9
    %v444 = vmul.f32 %v411, 0.9
    %v445 = vmul.f32 %v412, 0.9
    %v446 = vmul.f32 %v413, 0.9
    %v447 = vmul.f32 %v414, 0.9
    %v448 = vmul.f32 %v415, 0.9
    %v449 = vmul.f32 %v416, 0.9
    %v450 = vmul.f32 %v417, 0.9
    %v451 = vmul.f32 %v418, 0.9
    %v452 = vmul.f32 %v419, 0.9
    %v453 = vmul.f32 %v420, 0.9
    %v454 = vmul.f32 %v421, 0.9
    %v455 = vmul.f32 %v422, 0.9
    %v456 = vmul.f32 %v423, 0.9
    %v457 = vmul.f32 %v424, 0.9
    %v458 = vmul.f32 %v425, 0.9
    %v459 = vmul.f32 %v426, 0.9
    %v460 = vmul.f32 %v427, 0.9
    %v461 = vmul.f32 %v428, 0.9
    %v462 = vmul.f32 %v429, 0.9
    %v463 = vmul.f32 %v430, 0.9
    %v464 = vmul.f32 %v431, 0.9
    %v466 = vrot.slane %v432, 1
    %v467 = vrot.slane %v432, 2
    %v468 = vrot.slane %v432, 3
    %v469 = vrot.slane %v432, 4
    %v470 = vrot.slane %v432, 5
    %v471 = vrot.slane %v432, 6
    %v472 = vrot.slane %v432, 7
    %v473 = vperm.slane %v432, 0
    %v474 = vperm.slane %v466, 0
    %v475 = vperm.slane %v467, 0
    %v476 = vperm.slane %v468, 0
    %v477 = vperm.slane %v469, 0
    %v478 = vperm.slane %v470, 0
    %v479 = vperm.slane %v471, 0
    %v480 = vperm.slane %v472, 0
    %v489 = vadd.f32 %v433, %v473
    %v490 = vadd.f32 %v434, %v473
    %v491 = vadd.f32 %v435, %v473
    %v492 = vadd.f32 %v436, %v473
    %v493 = vadd.f32 %v437, %v474
    %v494 = vadd.f32 %v438, %v474
    %v495 = vadd.f32 %v439, %v474
    %v496 = vadd.f32 %v440, %v474
    %v497 = vadd.f32 %v441, %v475
    %v498 = vadd.f32 %v442, %v475
    %v499 = vadd.f32 %v443, %v475
    %v500 = vadd.f32 %v444, %v475
    %v501 = vadd.f32 %v445, %v476
    %v502 = vadd.f32 %v446, %v476
    %v503 = vadd.f32 %v447, %v476
    %v504 = vadd.f32 %v448, %v476
    %v505 = vadd.f32 %v449, %v477
    %v506 = vadd.f32 %v450, %v477
    %v507 = vadd.f32 %v451, %v477
    %v508 = vadd.f32 %v452, %v477
    %v509 = vadd.f32 %v453, %v478
    %v510 = vadd.f32 %v454, %v478
    %v511 = vadd.f32 %v455, %v478
    %v512 = vadd.f32 %v456, %v478
    %v513 = vadd.f32 %v457, %v479
    %v514 = vadd.f32 %v458, %v479
    %v515 = vadd.f32 %v459, %v479
    %v516 = vadd.f32 %v460, %v479
    %v517 = vadd.f32 %v461, %v480
    %v518 = vadd.f32 %v462, %v480
    %v519 = vadd.f32 %v463, %v480
    %v520 = vadd.f32 %v464, %v480
    %522 = vset.pattern.permute.xlu0 0
    %523 = vperm.xlu0 %522, %v56
    %v524 = vpop.permute.xlu0 %523
    %527 = vset.pattern.permute.xlu0 0
    %528 = vperm.xlu0 %527, %v57
    %v529 = vpop.permute.xlu0 %528
    %532 = vset.pattern.permute.xlu0 0
    %533 = vperm.xlu0 %532, %v58
    %v534 = vpop.permute.xlu0 %533
    %537 = vset.pattern.permute.xlu0 0
    %538 = vperm.xlu0 %537, %v59
    %v539 = vpop.permute.xlu0 %538
    %v541 = vmul.f32 %v524, %v489
    %v542 = vmul.f32 %v529, %v490
    %v543 = vmul.f32 %v534, %v491
    %v544 = vmul.f32 %v539, %v492
    %v545 = vmul.f32 %v524, %v493
    %v546 = vmul.f32 %v529, %v494
    %v547 = vmul.f32 %v534, %v495
    %v548 = vmul.f32 %v539, %v496
    %v549 = vmul.f32 %v524, %v497
    %v550 = vmul.f32 %v529, %v498
    %v551 = vmul.f32 %v534, %v499
    %v552 = vmul.f32 %v539, %v500
    %v553 = vmul.f32 %v524, %v501
    %v554 = vmul.f32 %v529, %v502
    %v555 = vmul.f32 %v534, %v503
    %v556 = vmul.f32 %v539, %v504
    %v557 = vmul.f32 %v524, %v505
    %v558 = vmul.f32 %v529, %v506
    %v559 = vmul.f32 %v534, %v507
    %v560 = vmul.f32 %v539, %v508
    %v561 = vmul.f32 %v524, %v509
    %v562 = vmul.f32 %v529, %v510
    %v563 = vmul.f32 %v534, %v511
    %v564 = vmul.f32 %v539, %v512
    %v565 = vmul.f32 %v524, %v513
    %v566 = vmul.f32 %v529, %v514
    %v567 = vmul.f32 %v534, %v515
    %v568 = vmul.f32 %v539, %v516
    %v569 = vmul.f32 %v524, %v517
    %v570 = vmul.f32 %v529, %v518
    %v571 = vmul.f32 %v534, %v519
    %v572 = vmul.f32 %v539, %v520
    %v573 = vmul.f32 %v132, %v541
    %v574 = vmul.f32 %v133, %v542
    %v575 = vmul.f32 %v134, %v543
    %v576 = vmul.f32 %v135, %v544
    %v577 = vmul.f32 %v136, %v545
    %v578 = vmul.f32 %v137, %v546
    %v579 = vmul.f32 %v138, %v547
    %v580 = vmul.f32 %v139, %v548
    %v581 = vmul.f32 %v140, %v549
    %v582 = vmul.f32 %v141, %v550
    %v583 = vmul.f32 %v142, %v551
    %v584 = vmul.f32 %v143, %v552
    %v585 = vmul.f32 %v144, %v553
    %v586 = vmul.f32 %v145, %v554
    %v587 = vmul.f32 %v146, %v555
    %v588 = vmul.f32 %v147, %v556
    %v589 = vmul.f32 %v148, %v557
    %v590 = vmul.f32 %v149, %v558
    %v591 = vmul.f32 %v150, %v559
    %v592 = vmul.f32 %v151, %v560
    %v593 = vmul.f32 %v152, %v561
    %v594 = vmul.f32 %v153, %v562
    %v595 = vmul.f32 %v154, %v563
    %v596 = vmul.f32 %v155, %v564
    %v597 = vmul.f32 %v156, %v565
    %v598 = vmul.f32 %v157, %v566
    %v599 = vmul.f32 %v158, %v567
    %v600 = vmul.f32 %v159, %v568
    %v601 = vmul.f32 %v160, %v569
    %v602 = vmul.f32 %v161, %v570
    %v603 = vmul.f32 %v162, %v571
    %v604 = vmul.f32 %v163, %v572
    %v605 = vadd.f32 %v573, %v574
    %v606 = vadd.f32 %v605, %v575
    %v607 = vadd.f32 %v606, %v576
    %v608 = vrot.slane %v607, 4
    %v609 = vadd.f32 %v607, %v608
    %v610 = vrot.slane %v609, 2
    %v611 = vadd.f32 %v609, %v610
    %v612 = vrot.slane %v611, 1
    %v613 = vadd.f32 %v611, %v612
    %v614 = vadd.f32 %v577, %v578
    %v615 = vadd.f32 %v614, %v579
    %v616 = vadd.f32 %v615, %v580
    %v617 = vrot.slane %v616, 4
    %v618 = vadd.f32 %v616, %v617
    %v619 = vrot.slane %v618, 2
    %v620 = vadd.f32 %v618, %v619
    %v621 = vrot.slane %v620, 1
    %v622 = vadd.f32 %v620, %v621
    %v623 = vadd.f32 %v581, %v582
    %v624 = vadd.f32 %v623, %v583
    %v625 = vadd.f32 %v624, %v584
    %v626 = vrot.slane %v625, 4
    %v627 = vadd.f32 %v625, %v626
    %v628 = vrot.slane %v627, 2
    %v629 = vadd.f32 %v627, %v628
    %v630 = vrot.slane %v629, 1
    %v631 = vadd.f32 %v629, %v630
    %v632 = vadd.f32 %v585, %v586
    %v633 = vadd.f32 %v632, %v587
    %v634 = vadd.f32 %v633, %v588
    %v635 = vrot.slane %v634, 4
    %v636 = vadd.f32 %v634, %v635
    %v637 = vrot.slane %v636, 2
    %v638 = vadd.f32 %v636, %v637
    %v639 = vrot.slane %v638, 1
    %v640 = vadd.f32 %v638, %v639
    %v641 = vadd.f32 %v589, %v590
    %v642 = vadd.f32 %v641, %v591
    %v643 = vadd.f32 %v642, %v592
    %v644 = vrot.slane %v643, 4
    %v645 = vadd.f32 %v643, %v644
    %v646 = vrot.slane %v645, 2
    %v647 = vadd.f32 %v645, %v646
    %v648 = vrot.slane %v647, 1
    %v649 = vadd.f32 %v647, %v648
    %v650 = vadd.f32 %v593, %v594
    %v651 = vadd.f32 %v650, %v595
    %v652 = vadd.f32 %v651, %v596
    %v653 = vrot.slane %v652, 4
    %v654 = vadd.f32 %v652, %v653
    %v655 = vrot.slane %v654, 2
    %v656 = vadd.f32 %v654, %v655
    %v657 = vrot.slane %v656, 1
    %v658 = vadd.f32 %v656, %v657
    %v659 = vadd.f32 %v597, %v598
    %v660 = vadd.f32 %v659, %v599
    %v661 = vadd.f32 %v660, %v600
    %v662 = vrot.slane %v661, 4
    %v663 = vadd.f32 %v661, %v662
    %v664 = vrot.slane %v663, 2
    %v665 = vadd.f32 %v663, %v664
    %v666 = vrot.slane %v665, 1
    %v667 = vadd.f32 %v665, %v666
    %v668 = vadd.f32 %v601, %v602
    %v669 = vadd.f32 %v668, %v603
    %v670 = vadd.f32 %v669, %v604
    %v671 = vrot.slane %v670, 4
    %v672 = vadd.f32 %v670, %v671
    %v673 = vrot.slane %v672, 2
    %v674 = vadd.f32 %v672, %v673
    %v675 = vrot.slane %v674, 1
    %v676 = vadd.f32 %v674, %v675
    %vm677 = vcmask 7168
    %v678 = vsel %vm677, %v56, 0.0
    %v679 = vsel %vm677, %v57, 0.0
    %v680 = vadd.f32 %v678, %v679
    %v681 = vsel %vm677, %v58, 0.0
    %v682 = vadd.f32 %v680, %v681
    %v683 = vsel %vm677, %v59, 0.0
    %v684 = vadd.f32 %v682, %v683
    %685 = vadd.xlane.f32.xlu0 %v684
    %v686 = vpop.xlane.xlu0 %685
    %v687 = vrot.slane %v686, 4
    %v688 = vadd.f32 %v686, %v687
    %v689 = vrot.slane %v688, 2
    %v690 = vadd.f32 %v688, %v689
    %v691 = vrot.slane %v690, 1
    %v692 = vadd.f32 %v690, %v691
    %s693 = vtos %v692
    %v694 = vsub.f32 0.0, %v613
    %v695 = vsub.f32 0.0, %v622
    %v696 = vsub.f32 0.0, %v631
    %v697 = vsub.f32 0.0, %v640
    %v698 = vsub.f32 0.0, %v649
    %v699 = vsub.f32 0.0, %v658
    %v700 = vsub.f32 0.0, %v667
    %v701 = vsub.f32 0.0, %v676
    %v702 = vmul.f32 %v55, 0.9
    %v703 = vstv %s693
    %v704 = vmul.f32 %v432, %v703
    %v705 = vadd.f32 %v702, %v704
    %v707 = vrot.slane %v705, 1
    %v708 = vrot.slane %v705, 2
    %v709 = vrot.slane %v705, 3
    %v710 = vrot.slane %v705, 4
    %v711 = vrot.slane %v705, 5
    %v712 = vrot.slane %v705, 6
    %v713 = vrot.slane %v705, 7
    %v722 = vmul.f32 %v301, %v705
    %v723 = vmul.f32 %v303, %v707
    %v724 = vmul.f32 %v305, %v708
    %v725 = vmul.f32 %v307, %v709
    %v726 = vmul.f32 %v309, %v710
    %v727 = vmul.f32 %v311, %v711
    %v728 = vmul.f32 %v313, %v712
    %v729 = vmul.f32 %v315, %v713
    %v730 = vadd.f32 %v694, %v722
    %v731 = vadd.f32 %v695, %v723
    %v732 = vadd.f32 %v696, %v724
    %v733 = vadd.f32 %v697, %v725
    %v734 = vadd.f32 %v698, %v726
    %v735 = vadd.f32 %v699, %v727
    %v736 = vadd.f32 %v700, %v728
    %v737 = vadd.f32 %v701, %v729
    %v746 = vrot.slane %v731, 7
    %vm747 = vcmask 1041409
    %v748 = vsel %vm747, %v746, %v730
    %v749 = vrot.slane %v732, 6
    %vm750 = vcmask 1042434
    %v751 = vsel %vm750, %v749, %v748
    %v752 = vrot.slane %v733, 5
    %vm753 = vcmask 1043459
    %v754 = vsel %vm753, %v752, %v751
    %v755 = vrot.slane %v734, 4
    %vm756 = vcmask 1044484
    %v757 = vsel %vm756, %v755, %v754
    %v758 = vrot.slane %v735, 3
    %vm759 = vcmask 1045509
    %v760 = vsel %vm759, %v758, %v757
    %v761 = vrot.slane %v736, 2
    %vm762 = vcmask 1046534
    %v763 = vsel %vm762, %v761, %v760
    %v764 = vrot.slane %v737, 1
    %vm765 = vcmask 1047559
    %v766 = vsel %vm765, %v764, %v763
    %768 = vst [vmem:[#allocation2] sm:$0xff] %v766
    // Predicated region
    $region22: #{tpu_custom_call.1} parent=1 // pred_check
      _
    $region23: #{tpu_custom_call.1} parent=1 // pred_check_branch
      %770 = sbr.rel (0) target = $region25
    $region24: #{tpu_custom_call.1} parent=1 // pred_region
      %772 = vsyncadd [#allocation3], 0
      %s774 = sshll.u32 [#allocation2], 4
      %s775 = int_to_ptr.vmem [resolvable:$true] %s774
      %s776 = sshll.u32 %s5, 4
      %s777 = int_to_ptr.hbm [resolvable:$true] %s776
      %779 = dma.vmem_to_hbm [thread:$0]  %s775, 128, %s777, [#allocation3]
    $region25: #{tpu_custom_call.1} parent=1 // pred_fallthru
      _
    // Predicated region
    $region26: #{tpu_custom_call.1} parent=1 // pred_check
      _
    $region27: #{tpu_custom_call.1} parent=1 // pred_check_branch
      %781 = sbr.rel (0) target = $region29
    $region28: #{tpu_custom_call.1} parent=1 // pred_region
      %783 = dma.done [#allocation3], 128
    $region29: #{tpu_custom_call.1} parent=1 // pred_fallthru
      _
    %784 = vsyncpa [#allocation3], 1

</llo_original>
